<compile_context>
chip_gen: v6e
topology: v6e:2x2x1
jax: 0.10.0
libtpu: 0.0.40
codegen_flags: <defaults>
</compile_context>

<pallas_src>
import functools

import jax
import jax.numpy as jnp
from jax import lax
from jax.experimental import pallas as pl
from jax.experimental.pallas import tpu as pltpu


def _round_up(x: int, m: int) -> int:
    return ((x + m - 1) // m) * m


def _sublane_pack(dtype) -> int:
    # rows per packed vreg sublane group: f32 -> 8, bf16 -> 16, int8/fp8 -> 32
    return max(8, 32 // max(1, jnp.dtype(dtype).itemsize))


def _vmem_capacity_bytes() -> int:
    try:
        return int(pltpu.get_tpu_info().vmem_capacity_bytes)
    except Exception:
        return 64 * 1024 * 1024  # conservative fallback (v7x per-TC VMEM)


def _pick_tile_n(d_out_p: int, d_in: int, w_itemsize: int, vmem_cap: int,
                 tile_n=None) -> int:
    """Pick a weight-row tile (multiple of 128 that divides padded D_out)."""
    units = d_out_p // 128
    # ~8 MiB/buffer on v7x (64 MiB VMEM), ~16 MiB on v5e/v6e (128 MiB VMEM).
    per_buf = max(vmem_cap // 8, 2 * 1024 * 1024)
    budget_u = max(1, per_buf // max(1, 128 * d_in * w_itemsize))
    if units >= 2:
        # Guarantee >= 2 grid steps so v7x's two TensorCores split the
        # weight stream (neutral on v5e/v6e: ~0.35 us extra per step).
        budget_u = min(budget_u, units // 2)
    if tile_n is not None:
        budget_u = max(1, min(budget_u, tile_n // 128))
    best = 1
    for d in range(1, budget_u + 1):   # exact divisor -> no partial tiles
        if units % d == 0:
            best = d
    return best * 128


def _linear_tanh_kernel(x_ref, w_ref, b_ref, o_ref):
    # x_ref: (Bp, D_in) resident; w_ref: (TN, D_in) torch-layout row tile;
    # b_ref: (1, Dp) resident; o_ref: (Bp, TN).
    tn = w_ref.shape[0]
    off = pl.multiple_of(pl.program_id(0) * tn, 128)
    y = lax.dot_general(
        x_ref[...], w_ref[...],
        dimension_numbers=(((1,), (1,)), ((), ())),   # x @ W^T on the MXU
        preferred_element_type=jnp.float32)
    y = y + b_ref[:, pl.ds(off, tn)].astype(jnp.float32)
    o_ref[...] = jnp.tanh(y).astype(o_ref.dtype)


def _linear_tanh_logsoftmax_kernel(x_ref, w_ref, b_ref, o_ref, acc_ref,
                                   *, d_valid: int):
    # Same matmul/tanh per tile, accumulated into a persistent f32 scratch;
    # full-row log_softmax is finalized on the last grid step (fused — no
    # second pallas_call / HBM round-trip).
    n = pl.program_id(0)
    tn = w_ref.shape[0]
    off = pl.multiple_of(n * tn, 128)
    y = lax.dot_general(
        x_ref[...], w_ref[...],
        dimension_numbers=(((1,), (1,)), ((), ())),
        preferred_element_type=jnp.float32)
    y = jnp.tanh(y + b_ref[:, pl.ds(off, tn)].astype(jnp.float32))
    acc_ref[:, pl.ds(off, tn)] = y

    @pl.when(n == pl.num_programs(0) - 1)
    def _():
        t = acc_ref[...]                                   # (Bp, Dp) f32
        bp, dp = t.shape
        cols = lax.broadcasted_iota(jnp.int32, (bp, dp), 1)
        t = jnp.where(cols < d_valid, t, -jnp.inf)         # mask padded cols
        m = jnp.max(t, axis=-1, keepdims=True)
        z = t - m
        lse = jnp.log(jnp.sum(jnp.exp(z), axis=-1, keepdims=True))
        o_ref[...] = (z - lse).astype(o_ref.dtype)


def pooler_forward(e_output: jax.Array,
                   weight: jax.Array,
                   bias: jax.Array,
                   length_prediction: bool = False,
                   *,
                   tile_n: int | None = None) -> jax.Array:
    """e_output: (B, S, D_in); weight: (D_out, D_in) torch (out, in); bias: (D_out,)."""
    B, _, D_in = e_output.shape
    D_out = weight.shape[0]
    out_dtype = e_output.dtype

    # First-token slice as a contiguous (B, D_in) slab: one dense DMA.
    x0 = e_output[:, 0, :]

    # Batch padded to the dtype-dependent sublane packing (dense vregs,
    # unmasked stores) — 8 for f32, 16 for bf16, 32 for int8/fp8.
    pack = max(_sublane_pack(x0.dtype), _sublane_pack(out_dtype))
    Bp = max(pack, _round_up(B, pack))
    if Bp != B:
        x0 = jnp.pad(x0, ((0, Bp - B), (0, 0)))

    # Pad D_out up to a multiple of 128 so streaming/pipelined weight tiles
    # work for arbitrary output widths (padded rows are zeros).
    Dp = _round_up(D_out, 128)
    w = weight if Dp == D_out else jnp.pad(weight, ((0, Dp - D_out), (0, 0)))
    b = bias if Dp == D_out else jnp.pad(bias, (0, Dp - D_out))
    b2d = b.reshape(1, Dp)
    # NOTE: for a weight-DMA-bound op like this, keeping `weight` in bf16 on
    # the caller side (one-time cast outside the hot path) roughly halves
    # wall-clock; the kernel accumulates in f32 either way.

    w_isz = jnp.dtype(w.dtype).itemsize
    x_isz = jnp.dtype(x0.dtype).itemsize
    o_isz = jnp.dtype(out_dtype).itemsize
    b_isz = jnp.dtype(b.dtype).itemsize

    vmem_cap = _vmem_capacity_bytes()
    tn = _pick_tile_n(Dp, D_in, w_isz, vmem_cap, tile_n)
    grid_n = Dp // tn

    # VMEM budget: double-buffered weight tile dominates.
    needed = (2 * tn * D_in * w_isz          # weight tiles (double-buffered)
              + 2 * Bp * D_in * x_isz        # resident x (be generous)
              + 2 * 8 * Dp * b_isz)          # resident bias (sublane-padded)
    if length_prediction:
        needed += Bp * Dp * o_isz + Bp * Dp * 4   # resident out + f32 scratch
    else:
        needed += 2 * Bp * tn * o_isz
    vmem_limit = max(min(int(1.5 * needed) + (4 << 20), vmem_cap * 3 // 4),
                     needed + (2 << 20))     # never below what tiles need

    cost = pl.CostEstimate(
        flops=2 * Bp * D_in * Dp,
        transcendentals=(2 if length_prediction else 1) * Bp * Dp,
        bytes_accessed=(Dp * D_in * w_isz + Bp * D_in * x_isz
                        + Bp * Dp * o_isz + Dp * b_isz))

    in_specs = [
        pl.BlockSpec((Bp, D_in), lambda n: (0, 0)),   # x resident
        pl.BlockSpec((tn, D_in), lambda n: (n, 0)),   # weight row tile (streamed)
        pl.BlockSpec((1, Dp), lambda n: (0, 0)),      # bias resident
    ]

    if length_prediction:
        kernel = functools.partial(_linear_tanh_logsoftmax_kernel,
                                   d_valid=D_out)
        out_specs = pl.BlockSpec((Bp, Dp), lambda n: (0, 0))   # resident output
        scratch_shapes = [pltpu.VMEM((Bp, Dp), jnp.float32)]
        dim_sems = ("arbitrary",)   # sequential accumulation into scratch
    else:
        kernel = _linear_tanh_kernel
        out_specs = pl.BlockSpec((Bp, tn), lambda n: (0, n))
        scratch_shapes = []
        dim_sems = ("parallel",)    # v7x: both TCs split the weight stream

    y = pl.pallas_call(
        kernel,
        out_shape=jax.ShapeDtypeStruct((Bp, Dp), out_dtype),
        grid_spec=pltpu.PrefetchScalarGridSpec(
            num_scalar_prefetch=0,
            grid=(grid_n,),
            in_specs=in_specs,
            out_specs=out_specs,
            scratch_shapes=scratch_shapes,
        ),
        compiler_params=pltpu.CompilerParams(
            dimension_semantics=dim_sems,
            vmem_limit_bytes=vmem_limit,
        ),
        cost_estimate=cost,
    )(x0, w, b2d)

    # TODO(synk): PyTorch also computes .argmax(-1) but discards the result;
    # intentionally not reproduced since it has no effect on the output.

    if Bp != B or Dp != D_out:
        y = y[:B, :D_out]
    return y


def _reference(e_output, weight, bias, length_prediction):
    out = jnp.tanh(e_output[:, 0, :] @ weight.T + bias)
    if length_prediction:
        out = jax.nn.log_softmax(out, axis=-1)
    return out


if __name__ == "__main__":
    key = jax.random.PRNGKey(0)

    def make(d_model, B=4, S=8, dtype=jnp.float32):
        k1, k2, k3 = jax.random.split(jax.random.fold_in(key, d_model), 3)
        e = jax.random.normal(k1, (B, S, d_model), dtype)
        bound = 1.0 / (d_model ** 0.5)
        w = jax.random.uniform(k2, (d_model, d_model), dtype, -bound, bound)
        b = jax.random.uniform(k3, (d_model,), dtype, -bound, bound)
        return e, w, b

    # --- 128-aligned d_model = 256 ---
    e, w, b = make(256)
    ref = _reference(e, w, b, False)
    ref_lp = _reference(e, w, b, True)

    # 1) Default tiling (tanh path).
    out = jax.block_until_ready(pooler_forward(e, w, b, False))
    assert out.shape == (4, 256)
    assert jnp.allclose(out, ref, atol=1e-4, rtol=1e-4), "mismatch (tanh)"

    # 2) Forced small tile -> grid=2, exercises the pipelined weight stream.
    out_t = jax.block_until_ready(pooler_forward(e, w, b, False, tile_n=128))
    assert jnp.allclose(out_t, ref, atol=1e-4, rtol=1e-4), "mismatch (tanh tiled)"

    # 3) Length-prediction: fused log_softmax (scratch accumulate + pl.when).
    out_lp = jax.block_until_ready(pooler_forward(e, w, b, True, tile_n=128))
    assert jnp.allclose(out_lp, ref_lp, atol=1e-4, rtol=1e-4), "mismatch (log_softmax)"

    # --- non-128-aligned d_model = 192: exercises D_out padding + masking ---
    e2, w2, b2 = make(192)
    ref2 = _reference(e2, w2, b2, False)
    ref2_lp = _reference(e2, w2, b2, True)

    out2 = jax.block_until_ready(pooler_forward(e2, w2, b2, False))
    assert out2.shape == (4, 192)
    assert jnp.allclose(out2, ref2, atol=1e-4, rtol=1e-4), "mismatch (tanh, unaligned)"

    out2_lp = jax.block_until_ready(pooler_forward(e2, w2, b2, True))
    assert jnp.allclose(out2_lp, ref2_lp, atol=1e-4, rtol=1e-4), \
        "mismatch (log_softmax, unaligned)"

    print("KERNEL_OK")
</pallas_src>

<mosaic_0001>
module attributes {stable_mosaic.version = 11 : i64} {
  func.func @_linear_tanh_kernel(%arg0: i32, %arg1: memref<8x256xf32, #tpu.memory_space<vmem>>, %arg2: memref<128x256xf32, #tpu.memory_space<vmem>>, %arg3: memref<1x256xf32, #tpu.memory_space<vmem>>, %arg4: memref<8x128xf32, #tpu.memory_space<vmem>>) attributes {dimension_semantics = [#tpu.dimension_semantics<parallel>], iteration_bounds = array<i64: 2>, scalar_prefetch = 0 : i64, scratch_operands = 0 : i64, tpu.core_type = #tpu.core_type<tc>, window_params = [{pipeline_mode = #tpu.pipeline_mode<synchronous>, transform_indices = @transform_0, window_bounds = array<i64: 8, 256>}, {transform_indices = @transform_1, window_bounds = array<i64: 128, 256>}, {pipeline_mode = #tpu.pipeline_mode<synchronous>, transform_indices = @transform_2, window_bounds = array<i64: 1, 256>}, {transform_indices = @transform_3, window_bounds = array<i64: 8, 128>}]} {
    %c128_i32 = arith.constant 128 : i32
    %0 = arith.muli %arg0, %c128_i32 : i32
    %1 = tpu.assume_multiple %0, 128 : i32
    %c0 = arith.constant 0 : index
    %c0_0 = arith.constant 0 : index
    %2 = vector.load %arg1[%c0, %c0_0] : memref<8x256xf32, #tpu.memory_space<vmem>>, vector<8x256xf32>
    %c0_1 = arith.constant 0 : index
    %c0_2 = arith.constant 0 : index
    %3 = vector.load %arg2[%c0_1, %c0_2] : memref<128x256xf32, #tpu.memory_space<vmem>>, vector<128x256xf32>
    %cst = arith.constant dense<0.000000e+00> : vector<8x128xf32>
    %4 = tpu.matmul %2, %3, %cst {dimension_numbers = #tpu.dot_dimension_numbers<[1], [1], [0], [0], [0, 0, 1, 0], [], []>} : vector<8x256xf32>, vector<128x256xf32>, vector<8x128xf32> -> vector<8x128xf32>
    %c0_3 = arith.constant 0 : index
    %5 = arith.index_cast %1 : i32 to index
    %6 = vector.load %arg3[%c0_3, %5] : memref<1x256xf32, #tpu.memory_space<vmem>>, vector<1x128xf32>
    %7 = vector.broadcast %6 : vector<1x128xf32> to vector<8x128xf32>
    %8 = arith.addf %4, %7 : vector<8x128xf32>
    %9 = math.tanh %8 : vector<8x128xf32>
    %c0_4 = arith.constant 0 : index
    %c0_5 = arith.constant 0 : index
    %10 = vector.load %arg4[%c0_4, %c0_5] : memref<8x128xf32, #tpu.memory_space<vmem>>, vector<8x128xf32>
    tpu.vector_store %arg4[%c0_4, %c0_5], %9 {strides = array<i32>} : memref<8x128xf32, #tpu.memory_space<vmem>>, vector<8x128xf32>,
    return
  }
  func.func @transform_0(%arg0: i32) -> (i32, i32) {
    %c0_i32 = arith.constant 0 : i32
    %c0_i32_0 = arith.constant 0 : i32
    %c0_i32_1 = arith.constant 0 : i32
    return %c0_i32, %c0_i32_0 : i32, i32
  }
  func.func @transform_1(%arg0: i32) -> (i32, i32) {
    %c0_i32 = arith.constant 0 : i32
    %c0_i32_0 = arith.constant 0 : i32
    return %arg0, %c0_i32 : i32, i32
  }
  func.func @transform_2(%arg0: i32) -> (i32, i32) {
    %c0_i32 = arith.constant 0 : i32
    %c0_i32_0 = arith.constant 0 : i32
    %c0_i32_1 = arith.constant 0 : i32
    return %c0_i32, %c0_i32_0 : i32, i32
  }
  func.func @transform_3(%arg0: i32) -> (i32, i32) {
    %c0_i32 = arith.constant 0 : i32
    %c0_i32_0 = arith.constant 0 : i32
    return %c0_i32, %arg0 : i32, i32
  }
}

</mosaic_0001>

<llo_original>
// kernel: tpu_custom_call.1
$region0: #{tpu_custom_call.1}
  #allocation0 [shape = 'u32[]', space=smem, size = 0x4, offset = 0x4, fixed_abs, tag = 'smem constant byte address 0x4 - core index']
  #allocation1 [shape = 'u32[144,128]{1,0:T(1,128)}', space=vmem, size = 0x12000, scoped, tag = 'internal scratch']
  %s0 = inlined_call_operand.hbm [shape: f32[8,256], index: 0, kind: input, shape index: {}]
  %s1 = inlined_call_operand.hbm [shape: f32[256,256], index: 1, kind: input, shape index: {}]
  %s2 = inlined_call_operand.vmem [shape: f32[1,256], index: 2, kind: input, shape index: {}]
  %s3 = inlined_call_operand.hbm [shape: f32[8,256], index: 3, kind: output, shape index: {}]
  %s4 = sld [smem:[#allocation0]]
  $region53: #{tpu_custom_call.1} parent=0
    _
  %s6 = ssub.s32 1, %s4
  %s7 = scalar_select 0, %s6, %s4
  $region1: #{tpu_custom_call.1} parent=0
    #allocation2 [shape = 'u8[8192]{0}', space=vmem, size = 0x2000, scoped, tag = 'input window, operand 0, single buffered']
    #allocation3 [shape = 's32[2]{0}', space=sflag, size = 0x8, scoped, tag = 'scoped memory for tpu_custom_call.1']
    #allocation4 [shape = 's32[2]{0}', space=sflag, size = 0x8, scoped, tag = 'scoped memory for tpu_custom_call.1']
    #allocation5 [shape = 'u8[262144]{0}', space=vmem, size = 0x40000, scoped, tag = 'input window, operand 1']
    #allocation6 [shape = 's32[2]{0}', space=sflag, size = 0x8, scoped, tag = 'scoped memory for tpu_custom_call.1']
    #allocation7 [shape = 'u8[8192]{0}', space=vmem, size = 0x2000, scoped, tag = 'output window, operand 0']
    %8 = vsyncpa [#allocation3], 0
    %9 = vsyncpa [#allocation6], 0
    %s10 = scalar_lea.sflag [#allocation6], 1
    %11 = vsyncpa %s10, 0
    %12 = vsyncpa [#allocation4], 0
    %s13 = scalar_lea.sflag [#allocation4], 1
    %14 = vsyncpa %s13, 0
    loop: start=0, step=1, limit=4
    $region2: #{tpu_custom_call.1} parent=1 // loop_pre_header
      _
    $region3: #{tpu_custom_call.1} parent=1 // loop_header
      %s16 = sphi 0, %s20
      %p17 = scmp.ge.s32.totalorder %s16, 4
      %s24 = sphi 0, %s24
      %s26 = sphi 0, %s24
      %s27 = sphi 0, %s26
      %s41 = sphi 0, %s27
      %s47 = sphi 0, %s49
      %s50 = sphi 0, %s47
      %s51 = sphi 0, %s50
      %s67 = sphi 0, %s51
      %s71 = sphi 0, %s71
      %s73 = sphi 0, %s71
      %s74 = sphi 0, %s73
      %s88 = sphi 0, %s74
      %s94 = sphi 0, %s96
      %s97 = sphi 0, %s94
      %s98 = sphi 0, %s97
      %s114 = sphi 0, %s98
    $region4: #{tpu_custom_call.1} parent=1 // loop_header_branch
      %19 = sbr.rel (%p17) target = $region8
    $region5: #{tpu_custom_call.1} parent=1 // loop_body
      %s21 = ssub.s32 %s16, 1
      %s22 = ssub.s32 %s16, 2
      %s23 = sadd.s32 %s16, 1
      %s25 = sadd.s32 %s24, 1
      %p28 = scmp.eq.s32.totalorder %s16, 1
      %p29 = scmp.ne.s32.totalorder %s24, %s26
      %p30 = scmp.eq.s32.totalorder %s16, 0
      %p31 = por %p29, %p30
      %p32 = scmp.ne.s32.totalorder %s24, %s26
      %p33 = scmp.eq.s32.totalorder %s21, 1
      %p34 = por %p32, %p33
      %p35 = scmp.ne.s32.totalorder %s26, %s27
      %p36 = scmp.eq.s32.totalorder %s21, 0
      %p37 = por %p35, %p36
      %p38 = scmp.ne.s32.totalorder %s26, %s27
      %p39 = scmp.eq.s32.totalorder %s22, 1
      %p40 = por %p38, %p39
      %p42 = scmp.ne.s32.totalorder %s27, %s41
      %p43 = scmp.eq.s32.totalorder %s22, 0
      %p44 = por %p42, %p43
      %s45 = ssub.s32 %s16, %s23
      %p46 = scmp.eq.s32.totalorder %s45, 0
      %s48 = sadd.s32 %s47, 1
      %s49 = scalar_select %p46, %s47, %s48
      %p52 = pneg %p46
      %p53 = scmp.eq.s32.totalorder %s16, 1
      %p54 = por %p52, %p53
      %p55 = scmp.ne.s32.totalorder %s47, %s50
      %p56 = scmp.eq.s32.totalorder %s16, 0
      %p57 = por %p55, %p56
      %p58 = scmp.ne.s32.totalorder %s47, %s50
      %p59 = scmp.eq.s32.totalorder %s21, 1
      %p60 = por %p58, %p59
      %p61 = scmp.ne.s32.totalorder %s50, %s51
      %p62 = scmp.eq.s32.totalorder %s21, 0
      %p63 = por %p61, %p62
      %p64 = scmp.ne.s32.totalorder %s50, %s51
      %p65 = scmp.eq.s32.totalorder %s22, 1
      %p66 = por %p64, %p65
      %p68 = scmp.ne.s32.totalorder %s51, %s67
      %p69 = scmp.eq.s32.totalorder %s22, 0
      %p70 = por %p68, %p69
      %s72 = sadd.s32 %s71, 1
      %p75 = scmp.eq.s32.totalorder %s16, 1
      %p76 = scmp.ne.s32.totalorder %s71, %s73
      %p77 = scmp.eq.s32.totalorder %s16, 0
      %p78 = por %p76, %p77
      %p79 = scmp.ne.s32.totalorder %s71, %s73
      %p80 = scmp.eq.s32.totalorder %s21, 1
      %p81 = por %p79, %p80
      %p82 = scmp.ne.s32.totalorder %s73, %s74
      %p83 = scmp.eq.s32.totalorder %s21, 0
      %p84 = por %p82, %p83
      %p85 = scmp.ne.s32.totalorder %s73, %s74
      %p86 = scmp.eq.s32.totalorder %s22, 1
      %p87 = por %p85, %p86
      %p89 = scmp.ne.s32.totalorder %s74, %s88
      %p90 = scmp.eq.s32.totalorder %s22, 0
      %p91 = por %p89, %p90
      %s92 = ssub.s32 %s16, %s23
      %p93 = scmp.eq.s32.totalorder %s92, 0
      %s95 = sadd.s32 %s94, 1
      %s96 = scalar_select %p93, %s94, %s95
      %p99 = pneg %p93
      %p100 = scmp.eq.s32.totalorder %s16, 1
      %p101 = por %p99, %p100
      %p102 = scmp.ne.s32.totalorder %s94, %s97
      %p103 = scmp.eq.s32.totalorder %s16, 0
      %p104 = por %p102, %p103
      %p105 = scmp.ne.s32.totalorder %s94, %s97
      %p106 = scmp.eq.s32.totalorder %s21, 1
      %p107 = por %p105, %p106
      %p108 = scmp.ne.s32.totalorder %s97, %s98
      %p109 = scmp.eq.s32.totalorder %s21, 0
      %p110 = por %p108, %p109
      %p111 = scmp.ne.s32.totalorder %s97, %s98
      %p112 = scmp.eq.s32.totalorder %s22, 1
      %p113 = por %p111, %p112
      %p115 = scmp.ne.s32.totalorder %s98, %s114
      %p116 = scmp.eq.s32.totalorder %s22, 0
      %p117 = por %p115, %p116
      %p118 = scmp.le.s32.totalorder 1, %s16
      %p119 = scmp.lt.s32.totalorder %s16, 3
      %p120 = pnand %p118, %p119
      %p121 = pneg %p120
      // Predicated region
      $region9: #{tpu_custom_call.1} parent=5 // pred_check
        _
      $region10: #{tpu_custom_call.1} parent=5 // pred_check_branch
        %123 = sbr.rel (%p120) target = $region12
      $region11: #{tpu_custom_call.1} parent=5 // pred_region
        %s124 = ssub.s32 %s16, 1
        // Predicated region
        $region13: #{tpu_custom_call.1} parent=11 // pred_check
          %p125 = pneg %p37
        $region14: #{tpu_custom_call.1} parent=11 // pred_check_branch
          %127 = sbr.rel (%p125) target = $region16
        $region15: #{tpu_custom_call.1} parent=11 // pred_region
          %s129 = ssub.s32 256, 256
          %130 = vsyncadd [#allocation3], %s129
          %s132 = sshll.u32 [#allocation2], 4
          %s133 = int_to_ptr.vmem [resolvable:$true] %s132
          %135 = dma.hbm_to_vmem [thread:$0]  %s0, 256, %s133, [#allocation3]
        $region16: #{tpu_custom_call.1} parent=11 // pred_fallthru
          _
        // Predicated region
        $region17: #{tpu_custom_call.1} parent=11 // pred_check
          %p136 = pneg %p84
        $region18: #{tpu_custom_call.1} parent=11 // pred_check_branch
          %138 = sbr.rel (%p136) target = $region20
        $region19: #{tpu_custom_call.1} parent=11 // pred_region
          _
        $region20: #{tpu_custom_call.1} parent=11 // pred_fallthru
          _
      $region12: #{tpu_custom_call.1} parent=5 // pred_fallthru
        _
      %p139 = scmp.lt.s32.totalorder %s16, 2
      // Predicated region
      $region21: #{tpu_custom_call.1} parent=5 // pred_check
        %p140 = pneg %p139
      $region22: #{tpu_custom_call.1} parent=5 // pred_check_branch
        %142 = sbr.rel (%p140) target = $region24
      $region23: #{tpu_custom_call.1} parent=5 // pred_region
        // Predicated region
        $region25: #{tpu_custom_call.1} parent=23 // pred_check
          %p143 = pneg %p57
        $region26: #{tpu_custom_call.1} parent=23 // pred_check_branch
          %145 = sbr.rel (%p143) target = $region28
        $region27: #{tpu_custom_call.1} parent=23 // pred_region
          %s146 = sand.u32 %s47, 1
          %s147 = scalar_lea.sflag [#allocation6], %s146
          %s148 = sand.u32 %s47, 1
          %s149 = smul.addr %s148, 256
          %s150 = scalar_lea.vmem [#allocation5], %s149
          %s151 = smul.u32 16, %s16
          %s153 = ssub.s32 4096, 4096
          %154 = vsyncadd %s147, %s153
          %s155 = smul.addr %s151, 2
          %s156 = smul.addr %s155, 128
          %s157 = scalar_lea.hbm %s1, %s156
          %s158 = sshll.u32 %s150, 4
          %s159 = int_to_ptr.vmem [resolvable:$true] %s158
          %164 = dma.hbm_to_vmem [thread:$0]  %s157, 4096, %s159, %s147, 256, 256, 16
        $region28: #{tpu_custom_call.1} parent=23 // pred_fallthru
          _
      $region24: #{tpu_custom_call.1} parent=5 // pred_fallthru
        _
      %p165 = scmp.le.s32.totalorder 1, %s16
      %p166 = scmp.lt.s32.totalorder %s16, 3
      %p167 = pnand %p165, %p166
      %p168 = pneg %p167
      // Predicated region
      $region29: #{tpu_custom_call.1} parent=5 // pred_check
        _
      $region30: #{tpu_custom_call.1} parent=5 // pred_check_branch
        %170 = sbr.rel (%p167) target = $region32
      $region31: #{tpu_custom_call.1} parent=5 // pred_region
        %s171 = ssub.s32 %s16, 1
        // Predicated region
        $region33: #{tpu_custom_call.1} parent=31 // pred_check
          %p172 = pneg %p37
        $region34: #{tpu_custom_call.1} parent=31 // pred_check_branch
          %174 = sbr.rel (%p172) target = $region36
        $region35: #{tpu_custom_call.1} parent=31 // pred_region
          %175 = dma.done [#allocation3], 256
        $region36: #{tpu_custom_call.1} parent=31 // pred_fallthru
          _
        %s176 = sand.u32 %s50, 1
        %s177 = scalar_lea.sflag [#allocation6], %s176
        %s178 = sand.u32 %s50, 1
        %s179 = smul.addr %s178, 256
        %s180 = scalar_lea.vmem [#allocation5], %s179
        // Predicated region
        $region37: #{tpu_custom_call.1} parent=31 // pred_check
          %p181 = pneg %p63
        $region38: #{tpu_custom_call.1} parent=31 // pred_check_branch
          %183 = sbr.rel (%p181) target = $region40
        $region39: #{tpu_custom_call.1} parent=31 // pred_region
          %184 = dma.done %s177, 4096
        $region40: #{tpu_custom_call.1} parent=31 // pred_fallthru
          _
        %p185 = pneg %p37
        %p186 = pneg %p34
        %s187 = sand.u32 %s50, 1
        %s188 = scalar_lea.sflag [#allocation6], %s187
        %s189 = sand.u32 %s50, 1
        %s190 = smul.addr %s189, 256
        %s191 = scalar_lea.vmem [#allocation5], %s190
        %p192 = pneg %p63
        %p193 = pneg %p60
        %p194 = pneg %p84
        %p195 = pneg %p81
        %p196 = pneg %p110
        %p197 = pneg %p107
        %s198 = sand.u32 %s97, 1
        %s199 = scalar_lea.sflag [#allocation4], %s198
        %s200 = sand.u32 %s97, 1
        %s201 = smul.addr %s200, 8
        %s202 = scalar_lea.vmem [#allocation7], %s201
        %s203 = smul.u32 16, %s21
        %s204 = smul.u32 %s21, 128
        %v205 = vld [vmem:[#allocation2] sm:$0xff]
        %v206 = vld [vmem:[#allocation2 + $0x8] sm:$0xff]
        %v207 = vld [vmem:[%s180] sm:$0xff]
        %v208 = vld [vmem:[%s180 + $0x8] sm:$0xff]
        %v209 = vld [vmem:[%s180 + $0x10] sm:$0xff]
        %v210 = vld [vmem:[%s180 + $0x18] sm:$0xff]
        %v211 = vld [vmem:[%s180 + $0x20] sm:$0xff]
        %v212 = vld [vmem:[%s180 + $0x28] sm:$0xff]
        %v213 = vld [vmem:[%s180 + $0x30] sm:$0xff]
        %v214 = vld [vmem:[%s180 + $0x38] sm:$0xff]
        %v215 = vld [vmem:[%s180 + $0x40] sm:$0xff]
        %v216 = vld [vmem:[%s180 + $0x48] sm:$0xff]
        %v217 = vld [vmem:[%s180 + $0x50] sm:$0xff]
        %v218 = vld [vmem:[%s180 + $0x58] sm:$0xff]
        %v219 = vld [vmem:[%s180 + $0x60] sm:$0xff]
        %v220 = vld [vmem:[%s180 + $0x68] sm:$0xff]
        %v221 = vld [vmem:[%s180 + $0x70] sm:$0xff]
        %v222 = vld [vmem:[%s180 + $0x78] sm:$0xff]
        %v223 = vld [vmem:[%s180 + $0x80] sm:$0xff]
        %v224 = vld [vmem:[%s180 + $0x88] sm:$0xff]
        %v225 = vld [vmem:[%s180 + $0x90] sm:$0xff]
        %v226 = vld [vmem:[%s180 + $0x98] sm:$0xff]
        %v227 = vld [vmem:[%s180 + $0xa0] sm:$0xff]
        %v228 = vld [vmem:[%s180 + $0xa8] sm:$0xff]
        %v229 = vld [vmem:[%s180 + $0xb0] sm:$0xff]
        %v230 = vld [vmem:[%s180 + $0xb8] sm:$0xff]
        %v231 = vld [vmem:[%s180 + $0xc0] sm:$0xff]
        %v232 = vld [vmem:[%s180 + $0xc8] sm:$0xff]
        %v233 = vld [vmem:[%s180 + $0xd0] sm:$0xff]
        %v234 = vld [vmem:[%s180 + $0xd8] sm:$0xff]
        %v235 = vld [vmem:[%s180 + $0xe0] sm:$0xff]
        %v236 = vld [vmem:[%s180 + $0xe8] sm:$0xff]
        %v237 = vld [vmem:[%s180 + $0xf0] sm:$0xff]
        %v238 = vld [vmem:[%s180 + $0xf8] sm:$0xff]
        %s239 = sshra.s32 %s204, 7
        %s240 = sand.u32 %s204, 127
        %s241 = scalar_lea.vmem %s2, %s239
        %v242 = vld [vmem:[%s241] sm:$0x1]
        %v244 = vlaneseq
        %v245 = vshrl.u32 %v244, 7
        %v246 = vsub.s32 0, %v245
        %v247 = vrot.slane %v242, %v246
        %249 = vmatprep.subr.mxu0 %v238
        %250 = vmatpush1.xpose.msra.mxu0 %v237
        %251 = vmatprep.subr.mxu0 %v236
        %252 = vmatpush1.xpose.msra.mxu0 %v235
        %253 = vmatprep.subr.mxu0 %v234
        %254 = vmatpush1.xpose.msra.mxu0 %v233
        %255 = vmatprep.subr.mxu0 %v232
        %256 = vmatpush1.xpose.msra.mxu0 %v231
        %257 = vmatprep.subr.mxu0 %v230
        %258 = vmatpush1.xpose.msra.mxu0 %v229
        %259 = vmatprep.subr.mxu0 %v228
        %260 = vmatpush1.xpose.msra.mxu0 %v227
        %261 = vmatprep.subr.mxu0 %v226
        %262 = vmatpush1.xpose.msra.mxu0 %v225
        %263 = vmatprep.subr.mxu0 %v224
        %264 = vmatpush1.xpose.msra.mxu0 %v223
        %265 = vmatprep.subr.mxu0 %v222
        %266 = vmatpush1.xpose.msra.mxu0 %v221
        %267 = vmatprep.subr.mxu0 %v220
        %268 = vmatpush1.xpose.msra.mxu0 %v219
        %269 = vmatprep.subr.mxu0 %v218
        %270 = vmatpush1.xpose.msra.mxu0 %v217
        %271 = vmatprep.subr.mxu0 %v216
        %272 = vmatpush1.xpose.msra.mxu0 %v215
        %273 = vmatprep.subr.mxu0 %v214
        %274 = vmatpush1.xpose.msra.mxu0 %v213
        %275 = vmatprep.subr.mxu0 %v212
        %276 = vmatpush1.xpose.msra.mxu0 %v211
        %277 = vmatprep.subr.mxu0 %v210
        %278 = vmatpush1.xpose.msra.mxu0 %v209
        %279 = vmatprep.subr.mxu0 %v208
        %280 = vmatpush1.xpose.msra.mxu0 %v207
        %281 = vmatprep.subr.mxu0 0.0
        %282 = vmatpush2.xpose.msra.mxu0 0.0
        %283 = vmatprep.subr.mxu0 0.0
        %284 = vmatpush2.xpose.msra.mxu0 0.0
        %285 = vmatprep.subr.mxu0 0.0
        %286 = vmatpush2.xpose.msra.mxu0 0.0
        %287 = vmatprep.subr.mxu0 0.0
        %288 = vmatpush2.xpose.msra.mxu0 0.0
        %289 = vmatprep.subr.mxu0 0.0
        %290 = vmatpush2.xpose.msra.mxu0 0.0
        %291 = vmatprep.subr.mxu0 0.0
        %292 = vmatpush2.xpose.msra.mxu0 0.0
        %293 = vmatprep.subr.mxu0 0.0
        %294 = vmatpush2.xpose.msra.mxu0 0.0
        %295 = vmatprep.subr.mxu0 0.0
        %296 = vmatpush2.xpose.msra.mxu0 0.0
        %297 = vmatprep.subr.mxu0 0.0
        %298 = vmatpush2.xpose.msra.mxu0 0.0
        %299 = vmatprep.subr.mxu0 0.0
        %300 = vmatpush2.xpose.msra.mxu0 0.0
        %301 = vmatprep.subr.mxu0 0.0
        %302 = vmatpush2.xpose.msra.mxu0 0.0
        %303 = vmatprep.subr.mxu0 0.0
        %304 = vmatpush2.xpose.msra.mxu0 0.0
        %305 = vmatprep.subr.mxu0 0.0
        %306 = vmatpush2.xpose.msra.mxu0 0.0
        %307 = vmatprep.subr.mxu0 0.0
        %308 = vmatpush2.xpose.msra.mxu0 0.0
        %309 = vmatprep.subr.mxu0 0.0
        %310 = vmatpush2.xpose.msra.mxu0 0.0
        %311 = vmatprep.subr.mxu0 0.0
        %312 = vmatpush2.xpose.msra.mxu0 0.0
        %313 = vmatprep.mubr.f32.mxu0 %v206
        %314 = vmatmul.mubr.f32.gmra.mxu0 %v205
        %v315 = vpop.f32.mrf.mxu0
        %v316 = vadd.f32 %v247, %v315
        %v317 = vpop.f32.mrf.mxu0
        %318 = vdwg.mxu0
        %v319 = vtanh.pop %v316
        %320 = vst [vmem:[%s202] sm:$0xff] %v319
        %s321 = sand.u32 %s97, 1
        %s322 = scalar_lea.sflag [#allocation4], %s321
        %s323 = sand.u32 %s97, 1
        %s324 = smul.addr %s323, 8
        %s325 = scalar_lea.vmem [#allocation7], %s324
        // Predicated region
        $region41: #{tpu_custom_call.1} parent=31 // pred_check
          %p326 = pneg %p107
        $region42: #{tpu_custom_call.1} parent=31 // pred_check_branch
          %328 = sbr.rel (%p326) target = $region44
        $region43: #{tpu_custom_call.1} parent=31 // pred_region
          %s330 = ssub.s32 128, 128
          %331 = vsyncadd %s322, %s330
          %s332 = smul.addr %s21, 128
          %s333 = scalar_lea.hbm %s3, %s332
          %s335 = sshll.u32 %s325, 4
          %s336 = int_to_ptr.vmem [resolvable:$true] %s335
          %338 = dma.vmem_to_hbm [thread:$0]  %s336, 128, %s333, %s322
        $region44: #{tpu_custom_call.1} parent=31 // pred_fallthru
          _
      $region32: #{tpu_custom_call.1} parent=5 // pred_fallthru
        _
      %p339 = scmp.le.s32.totalorder 2, %s16
      // Predicated region
      $region45: #{tpu_custom_call.1} parent=5 // pred_check
        %p340 = pneg %p339
      $region46: #{tpu_custom_call.1} parent=5 // pred_check_branch
        %342 = sbr.rel (%p340) target = $region48
      $region47: #{tpu_custom_call.1} parent=5 // pred_region
        %s343 = ssub.s32 %s16, 2
        // Predicated region
        $region49: #{tpu_custom_call.1} parent=47 // pred_check
          %p344 = pneg %p113
        $region50: #{tpu_custom_call.1} parent=47 // pred_check_branch
          %346 = sbr.rel (%p344) target = $region52
        $region51: #{tpu_custom_call.1} parent=47 // pred_region
          %s347 = sand.u32 %s98, 1
          %s348 = scalar_lea.sflag [#allocation4], %s347
          %s349 = sand.u32 %s98, 1
          %s350 = smul.addr %s349, 8
          %s351 = scalar_lea.vmem [#allocation7], %s350
          %352 = dma.done %s348, 128
        $region52: #{tpu_custom_call.1} parent=47 // pred_fallthru
          _
      $region48: #{tpu_custom_call.1} parent=5 // pred_fallthru
        _
    $region6: #{tpu_custom_call.1} parent=1 // loop_footer
      %s20 = sadd.s32 1, %s16
    $region7: #{tpu_custom_call.1} parent=1 // loop_footer_branch
      %15 = sbr.rel target = $region3
    $region8: #{tpu_custom_call.1} parent=1 // loop_exit
      _
    %353 = vsyncpa [#allocation3], 1
    %s354 = scalar_lea.sflag [#allocation3], 1
    %355 = vsyncpa %s354, 1
    %356 = vsyncpa [#allocation6], 1
    %s357 = scalar_lea.sflag [#allocation6], 1
    %358 = vsyncpa %s357, 1
    %359 = vsyncpa [#allocation4], 1
    %s360 = scalar_lea.sflag [#allocation4], 1
    %361 = vsyncpa %s360, 1

</llo_original>
